<compile_context>
chip_gen: v7x
topology: tpu7x:2x2x1
jax: 0.10.0
libtpu: 0.0.40
codegen_flags: <defaults>
</compile_context>

<pallas_src>
import functools

import jax
import jax.numpy as jnp
from jax.experimental import pallas as pl
from jax.experimental.pallas import tpu as pltpu

LANE = 128
_VMEM_LIMIT = 48 * 1024 * 1024   # <= v7x 64 MiB physical VMEM; ample on v5e/v6e
_TM_MAX = 8192                   # ~<20 MiB peak per step at F_pad=128 -> fits all gens


def _round_up(x, m):
    return (x + m - 1) // m * m


def _swish(y):
    # swish(y) = y * sigmoid(y) = 0.5*y*(tanh(0.5*y)+1): one EUP op per vreg.
    return 0.5 * y * (jnp.tanh(0.5 * y) + 1.0)


# ----------------------------------------------------------------------------
# Fused kernel: stem conv (as matmul) + swish + pointwise expand + swish +
# global-average-pool accumulation + _fc epilogue at the last grid step.
# ----------------------------------------------------------------------------
def _fused_kernel(s, m, inv_s,
                  p_ref, ws_ref, bs_ref, wp_ref, bpw_ref, wfc_ref, bfc_ref,
                  o_ref, acc_ref):
    i = pl.program_id(0)
    tm = p_ref.shape[0]
    bpad = acc_ref.shape[0]

    @pl.when(i == 0)
    def _():
        acc_ref[...] = jnp.zeros_like(acc_ref)

    # Stem conv as matmul + swish (bf16 operands, f32 accumulate/epilogue).
    y = jnp.dot(p_ref[...], ws_ref[...], preferred_element_type=jnp.float32)
    y = _swish(y + bs_ref[...])
    # Pointwise expand + swish.
    y = jnp.dot(y.astype(jnp.bfloat16), wp_ref[...],
                preferred_element_type=jnp.float32)
    y = _swish(y + bpw_ref[...])

    # Zero ragged-tail rows (grid uses cdiv; the tail tile holds unspecified
    # data) before they can touch the pooled accumulator.
    row = i * tm + jax.lax.broadcasted_iota(jnp.int32, (tm, 1), 0)
    y = jnp.where(row < m, y, 0.0)

    # Global-average-pool accumulation: 0/1 membership tile built in-kernel,
    # [bpad, tm] @ [tm, F_pad] on the MXU into the resident f32 accumulator.
    rows = i * tm + jax.lax.broadcasted_iota(jnp.int32, (bpad, tm), 1)
    lo = jax.lax.broadcasted_iota(jnp.int32, (bpad, tm), 0) * s
    memb = ((rows >= lo) & (rows < lo + s)).astype(jnp.bfloat16)
    acc_ref[...] += jnp.dot(memb, y.astype(jnp.bfloat16),
                            preferred_element_type=jnp.float32)

    # _fc epilogue: pooled mean kept in f32, f32 fc weights (tiny matmul).
    @pl.when(i == pl.num_programs(0) - 1)
    def _():
        pooled = acc_ref[...] * inv_s
        logits = jnp.dot(pooled, wfc_ref[...],
                         preferred_element_type=jnp.float32) + bfc_ref[...]
        o_ref[...] = logits


# ----------------------------------------------------------------------------
# Full forward: Pollen.forward(img_data) -> logits [B, num_classes]
# ----------------------------------------------------------------------------
def pollen_forward(x_nchw, params):
    w_stem, b_stem = params["w_stem"], params["b_stem"]
    w_pw, b_pw = params["w_pw"], params["b_pw"]
    w_fc, b_fc = params["w_fc"], params["b_fc"]

    cstem = w_stem.shape[0]
    f = w_pw.shape[1]
    c = w_fc.shape[1]
    b = x_nchw.shape[0]

    cs_pad = _round_up(cstem, LANE)
    f_pad = _round_up(f, LANE)
    c_pad = _round_up(c, LANE)
    b_pad = _round_up(b, 8)

    # im2col in bf16 directly (no separate astype pass), channel-last output
    # so the big tensor never needs an HBM-materializing transpose.
    patches = jax.lax.conv_general_dilated_patches(
        x_nchw.astype(jnp.bfloat16), filter_shape=(3, 3),
        window_strides=(2, 2), padding="SAME",
        dimension_numbers=("NCHW", "OIHW", "NHWC"))
    _, h2_, w2_, k = patches.shape              # k = Cin*9, channel slowest
    s = h2_ * w2_
    m = b * s
    patches = patches.reshape(m, k)             # contiguous reshape, no transpose

    tm = min(_TM_MAX, _round_up(m, LANE))
    grid = pl.cdiv(m, tm)                       # ragged tail masked in-kernel

    # Zero-padded, lane-dense parameter slabs (bf16 matmul operands, f32
    # biases; fc weights kept f32 for the tiny high-accuracy epilogue).
    w_stem_p = (jnp.zeros((k, cs_pad), jnp.float32)
                .at[:, :cstem].set(w_stem.reshape(cstem, k).T)).astype(jnp.bfloat16)
    b_stem_p = jnp.zeros((1, cs_pad), jnp.float32).at[0, :cstem].set(b_stem)
    w_pw_p = (jnp.zeros((cs_pad, f_pad), jnp.float32)
              .at[:cstem, :f].set(w_pw)).astype(jnp.bfloat16)
    b_pw_p = jnp.zeros((1, f_pad), jnp.float32).at[0, :f].set(b_pw)
    w_fc_p = jnp.zeros((f_pad, c_pad), jnp.float32).at[:f, :c].set(w_fc)
    b_fc_p = jnp.zeros((1, c_pad), jnp.float32).at[0, :c].set(b_fc)

    logits_pad = pl.pallas_call(
        functools.partial(_fused_kernel, s, m, 1.0 / float(s)),
        out_shape=jax.ShapeDtypeStruct((b_pad, c_pad), jnp.float32),
        grid=(grid,),
        in_specs=[
            pl.BlockSpec((tm, k), lambda i: (i, 0)),         # streamed patches
            pl.BlockSpec((k, cs_pad), lambda i: (0, 0)),     # resident weights
            pl.BlockSpec((1, cs_pad), lambda i: (0, 0)),
            pl.BlockSpec((cs_pad, f_pad), lambda i: (0, 0)),
            pl.BlockSpec((1, f_pad), lambda i: (0, 0)),
            pl.BlockSpec((f_pad, c_pad), lambda i: (0, 0)),
            pl.BlockSpec((1, c_pad), lambda i: (0, 0)),
        ],
        out_specs=pl.BlockSpec((b_pad, c_pad), lambda i: (0, 0)),
        scratch_shapes=[pltpu.VMEM((b_pad, f_pad), jnp.float32)],
        compiler_params=pltpu.CompilerParams(
            dimension_semantics=("arbitrary",),
            vmem_limit_bytes=_VMEM_LIMIT),
    )(patches, w_stem_p, b_stem_p, w_pw_p, b_pw_p, w_fc_p, b_fc_p)
    return logits_pad[:b, :c]


# Pure-JAX f32 mirror of the same forward, for a sanity check.
def _reference_forward(x_nchw, params):
    patches = jax.lax.conv_general_dilated_patches(
        x_nchw, filter_shape=(3, 3), window_strides=(2, 2), padding="SAME",
        dimension_numbers=("NCHW", "OIHW", "NHWC"))
    b, h2_, w2_, k = patches.shape
    s = h2_ * w2_
    p = patches.reshape(b * s, k)
    w_stem = params["w_stem"].reshape(params["w_stem"].shape[0], -1).T
    y = p @ w_stem + params["b_stem"][None, :]
    y = y * jax.nn.sigmoid(y)
    y = y @ params["w_pw"] + params["b_pw"][None, :]
    y = y * jax.nn.sigmoid(y)
    pooled = y.reshape(b, s, -1).mean(axis=1)
    return pooled @ params["w_fc"] + params["b_fc"][None, :]


if __name__ == "__main__":
    B, Cin, H, W = 2, 3, 16, 16
    num_classes, num_features = 8, 32
    Cstem = 16

    key = jax.random.PRNGKey(0)
    k1, k2, k3, k4, k5, k6, k7 = jax.random.split(key, 7)
    x = jax.random.normal(k1, (B, Cin, H, W), jnp.float32)        # NCHW like PyTorch

    params = {
        "w_stem": jax.random.normal(k2, (Cstem, Cin, 3, 3), jnp.float32) * 0.1,
        "b_stem": jax.random.normal(k3, (Cstem,), jnp.float32) * 0.1,
        "w_pw":   jax.random.normal(k4, (Cstem, num_features), jnp.float32) * 0.1,
        "b_pw":   jax.random.normal(k5, (num_features,), jnp.float32) * 0.1,
        "w_fc":   jax.random.normal(k6, (num_features, num_classes), jnp.float32) * 0.1,
        "b_fc":   jax.random.normal(k7, (num_classes,), jnp.float32) * 0.1,
    }

    out = jax.jit(pollen_forward)(x, params)
    jax.block_until_ready(out)
    assert out.shape == (B, num_classes), out.shape
    assert out.dtype == jnp.float32

    ref = _reference_forward(x, params)
    max_err = float(jnp.max(jnp.abs(out - ref)))
    assert max_err < 5e-2, f"max abs err {max_err}"   # bf16 operands vs f32 ref

    print("KERNEL_OK")
</pallas_src>

<mosaic_0001>
module attributes {stable_mosaic.version = 11 : i64} {
  func.func @_fused_kernel(%arg0: i32, %arg1: memref<128x27xbf16, #tpu.memory_space<vmem>>, %arg2: memref<27x128xbf16, #tpu.memory_space<vmem>>, %arg3: memref<1x128xf32, #tpu.memory_space<vmem>>, %arg4: memref<128x128xbf16, #tpu.memory_space<vmem>>, %arg5: memref<1x128xf32, #tpu.memory_space<vmem>>, %arg6: memref<128x128xf32, #tpu.memory_space<vmem>>, %arg7: memref<1x128xf32, #tpu.memory_space<vmem>>, %arg8: memref<8x128xf32, #tpu.memory_space<vmem>>, %arg9: memref<8x128xf32, #tpu.memory_space<vmem>>) attributes {dimension_semantics = [#tpu.dimension_semantics<arbitrary>], iteration_bounds = array<i64: 1>, scalar_prefetch = 0 : i64, scratch_operands = 1 : i64, tpu.core_type = #tpu.core_type<tc>, window_params = [{transform_indices = @transform_0, window_bounds = array<i64: 128, 27>}, {pipeline_mode = #tpu.pipeline_mode<synchronous>, transform_indices = @transform_1, window_bounds = array<i64: 27, 128>}, {pipeline_mode = #tpu.pipeline_mode<synchronous>, transform_indices = @transform_2, window_bounds = array<i64: 1, 128>}, {pipeline_mode = #tpu.pipeline_mode<synchronous>, transform_indices = @transform_3, window_bounds = array<i64: 128, 128>}, {pipeline_mode = #tpu.pipeline_mode<synchronous>, transform_indices = @transform_4, window_bounds = array<i64: 1, 128>}, {pipeline_mode = #tpu.pipeline_mode<synchronous>, transform_indices = @transform_5, window_bounds = array<i64: 128, 128>}, {pipeline_mode = #tpu.pipeline_mode<synchronous>, transform_indices = @transform_6, window_bounds = array<i64: 1, 128>}, {pipeline_mode = #tpu.pipeline_mode<synchronous>, transform_indices = @transform_7, window_bounds = array<i64: 8, 128>}]} {
    %c0_i32 = arith.constant 0 : i32
    %0 = arith.cmpi eq, %arg0, %c0_i32 : i32
    %1 = arith.extui %0 : i1 to i32
    %c0_i32_0 = arith.constant 0 : i32
    %2 = arith.cmpi ne, %1, %c0_i32_0 : i32
    scf.if %2 {
      %cst_28 = arith.constant 0.000000e+00 : f32
      %64 = vector.broadcast %cst_28 : f32 to vector<8x128xf32>
      %c0_29 = arith.constant 0 : index
      %c0_30 = arith.constant 0 : index
      %65 = vector.load %arg9[%c0_29, %c0_30] : memref<8x128xf32, #tpu.memory_space<vmem>>, vector<8x128xf32>
      tpu.vector_store %arg9[%c0_29, %c0_30], %64 {strides = array<i32>} : memref<8x128xf32, #tpu.memory_space<vmem>>, vector<8x128xf32>,
    } else {
    }
    %c0 = arith.constant 0 : index
    %c0_1 = arith.constant 0 : index
    %3 = vector.load %arg1[%c0, %c0_1] : memref<128x27xbf16, #tpu.memory_space<vmem>>, vector<128x27xbf16>
    %c0_2 = arith.constant 0 : index
    %c0_3 = arith.constant 0 : index
    %4 = vector.load %arg2[%c0_2, %c0_3] : memref<27x128xbf16, #tpu.memory_space<vmem>>, vector<27x128xbf16>
    %cst = arith.constant dense<0.000000e+00> : vector<128x128xf32>
    %5 = tpu.matmul %3, %4, %cst {dimension_numbers = #tpu.dot_dimension_numbers<[1], [0], [0], [1], [0, 0, 1, 1], [], []>} : vector<128x27xbf16>, vector<27x128xbf16>, vector<128x128xf32> -> vector<128x128xf32>
    %c0_4 = arith.constant 0 : index
    %c0_5 = arith.constant 0 : index
    %6 = vector.load %arg3[%c0_4, %c0_5] : memref<1x128xf32, #tpu.memory_space<vmem>>, vector<1x128xf32>
    %7 = vector.broadcast %6 : vector<1x128xf32> to vector<128x128xf32>
    %8 = arith.addf %5, %7 : vector<128x128xf32>
    %cst_6 = arith.constant 5.000000e-01 : f32
    %9 = vector.broadcast %cst_6 : f32 to vector<128x128xf32>
    %10 = arith.mulf %9, %8 : vector<128x128xf32>
    %cst_7 = arith.constant 5.000000e-01 : f32
    %11 = vector.broadcast %cst_7 : f32 to vector<128x128xf32>
    %12 = arith.mulf %11, %8 : vector<128x128xf32>
    %13 = math.tanh %12 : vector<128x128xf32>
    %cst_8 = arith.constant 1.000000e+00 : f32
    %14 = vector.broadcast %cst_8 : f32 to vector<128x128xf32>
    %15 = arith.addf %13, %14 : vector<128x128xf32>
    %16 = arith.mulf %10, %15 : vector<128x128xf32>
    %17 = arith.truncf %16 : vector<128x128xf32> to vector<128x128xbf16>
    %c0_9 = arith.constant 0 : index
    %c0_10 = arith.constant 0 : index
    %18 = vector.load %arg4[%c0_9, %c0_10] : memref<128x128xbf16, #tpu.memory_space<vmem>>, vector<128x128xbf16>
    %cst_11 = arith.constant dense<0.000000e+00> : vector<128x128xf32>
    %19 = tpu.matmul %17, %18, %cst_11 {dimension_numbers = #tpu.dot_dimension_numbers<[1], [0], [0], [1], [0, 0, 1, 1], [], []>} : vector<128x128xbf16>, vector<128x128xbf16>, vector<128x128xf32> -> vector<128x128xf32>
    %c0_12 = arith.constant 0 : index
    %c0_13 = arith.constant 0 : index
    %20 = vector.load %arg5[%c0_12, %c0_13] : memref<1x128xf32, #tpu.memory_space<vmem>>, vector<1x128xf32>
    %21 = vector.broadcast %20 : vector<1x128xf32> to vector<128x128xf32>
    %22 = arith.addf %19, %21 : vector<128x128xf32>
    %cst_14 = arith.constant 5.000000e-01 : f32
    %23 = vector.broadcast %cst_14 : f32 to vector<128x128xf32>
    %24 = arith.mulf %23, %22 : vector<128x128xf32>
    %cst_15 = arith.constant 5.000000e-01 : f32
    %25 = vector.broadcast %cst_15 : f32 to vector<128x128xf32>
    %26 = arith.mulf %25, %22 : vector<128x128xf32>
    %27 = math.tanh %26 : vector<128x128xf32>
    %cst_16 = arith.constant 1.000000e+00 : f32
    %28 = vector.broadcast %cst_16 : f32 to vector<128x128xf32>
    %29 = arith.addf %27, %28 : vector<128x128xf32>
    %30 = arith.mulf %24, %29 : vector<128x128xf32>
    %c128_i32 = arith.constant 128 : i32
    %31 = arith.muli %arg0, %c128_i32 : i32
    %32 = tpu.iota {dimensions = array<i32: 0>} : vector<128x1xi32>
    %33 = vector.broadcast %31 : i32 to vector<128x1xi32>
    %34 = arith.addi %33, %32 : vector<128x1xi32>
    %c128_i32_17 = arith.constant 128 : i32
    %35 = vector.broadcast %c128_i32_17 : i32 to vector<128x1xi32>
    %36 = arith.cmpi slt, %34, %35 : vector<128x1xi32>
    %cst_18 = arith.constant 0.000000e+00 : f32
    %37 = vector.shape_cast %36 : vector<128x1xi1> to vector<128x1xi1>
    %38 = vector.broadcast %37 : vector<128x1xi1> to vector<128x128xi1>
    %39 = vector.broadcast %cst_18 : f32 to vector<128x128xf32>
    %40 = arith.select %38, %30, %39 : vector<128x128xi1>, vector<128x128xf32>
    %c128_i32_19 = arith.constant 128 : i32
    %41 = arith.muli %arg0, %c128_i32_19 : i32
    %42 = tpu.iota {dimensions = array<i32: 1>} : vector<8x128xi32>
    %43 = vector.broadcast %41 : i32 to vector<8x128xi32>
    %44 = arith.addi %43, %42 : vector<8x128xi32>
    %45 = tpu.iota {dimensions = array<i32: 0>} : vector<8x128xi32>
    %c64_i32 = arith.constant 64 : i32
    %46 = vector.broadcast %c64_i32 : i32 to vector<8x128xi32>
    %47 = arith.muli %45, %46 : vector<8x128xi32>
    %48 = arith.cmpi sge, %44, %47 : vector<8x128xi32>
    %c64_i32_20 = arith.constant 64 : i32
    %49 = vector.broadcast %c64_i32_20 : i32 to vector<8x128xi32>
    %50 = arith.addi %47, %49 : vector<8x128xi32>
    %51 = arith.cmpi slt, %44, %50 : vector<8x128xi32>
    %52 = arith.andi %48, %51 : vector<8x128xi1>
    %53 = arith.extui %52 : vector<8x128xi1> to vector<8x128xi32>
    %54 = arith.sitofp %53 : vector<8x128xi32> to vector<8x128xf32>
    %55 = arith.truncf %54 : vector<8x128xf32> to vector<8x128xbf16>
    %c0_21 = arith.constant 0 : index
    %c0_22 = arith.constant 0 : index
    %56 = vector.load %arg9[%c0_21, %c0_22] : memref<8x128xf32, #tpu.memory_space<vmem>>, vector<8x128xf32>
    %57 = arith.truncf %40 : vector<128x128xf32> to vector<128x128xbf16>
    %cst_23 = arith.constant dense<0.000000e+00> : vector<8x128xf32>
    %58 = tpu.matmul %55, %57, %cst_23 {dimension_numbers = #tpu.dot_dimension_numbers<[1], [0], [0], [1], [0, 0, 1, 1], [], []>} : vector<8x128xbf16>, vector<128x128xbf16>, vector<8x128xf32> -> vector<8x128xf32>
    %59 = arith.addf %56, %58 : vector<8x128xf32>
    %c0_24 = arith.constant 0 : index
    %c0_25 = arith.constant 0 : index
    %60 = vector.load %arg9[%c0_24, %c0_25] : memref<8x128xf32, #tpu.memory_space<vmem>>, vector<8x128xf32>
    tpu.vector_store %arg9[%c0_24, %c0_25], %59 {strides = array<i32>} : memref<8x128xf32, #tpu.memory_space<vmem>>, vector<8x128xf32>,
    %c0_i32_26 = arith.constant 0 : i32
    %61 = arith.cmpi eq, %arg0, %c0_i32_26 : i32
    %62 = arith.extui %61 : i1 to i32
    %c0_i32_27 = arith.constant 0 : i32
    %63 = arith.cmpi ne, %62, %c0_i32_27 : i32
    scf.if %63 {
      %c0_28 = arith.constant 0 : index
      %c0_29 = arith.constant 0 : index
      %64 = vector.load %arg9[%c0_28, %c0_29] : memref<8x128xf32, #tpu.memory_space<vmem>>, vector<8x128xf32>
      %cst_30 = arith.constant 1.562500e-02 : f32
      %65 = vector.broadcast %cst_30 : f32 to vector<8x128xf32>
      %66 = arith.mulf %64, %65 : vector<8x128xf32>
      %c0_31 = arith.constant 0 : index
      %c0_32 = arith.constant 0 : index
      %67 = vector.load %arg6[%c0_31, %c0_32] : memref<128x128xf32, #tpu.memory_space<vmem>>, vector<128x128xf32>
      %cst_33 = arith.constant dense<0.000000e+00> : vector<8x128xf32>
      %68 = tpu.matmul %66, %67, %cst_33 {dimension_numbers = #tpu.dot_dimension_numbers<[1], [0], [0], [1], [0, 0, 1, 1], [], []>} : vector<8x128xf32>, vector<128x128xf32>, vector<8x128xf32> -> vector<8x128xf32>
      %c0_34 = arith.constant 0 : index
      %c0_35 = arith.constant 0 : index
      %69 = vector.load %arg7[%c0_34, %c0_35] : memref<1x128xf32, #tpu.memory_space<vmem>>, vector<1x128xf32>
      %70 = vector.broadcast %69 : vector<1x128xf32> to vector<8x128xf32>
      %71 = arith.addf %68, %70 : vector<8x128xf32>
      %c0_36 = arith.constant 0 : index
      %c0_37 = arith.constant 0 : index
      %72 = vector.load %arg8[%c0_36, %c0_37] : memref<8x128xf32, #tpu.memory_space<vmem>>, vector<8x128xf32>
      tpu.vector_store %arg8[%c0_36, %c0_37], %71 {strides = array<i32>} : memref<8x128xf32, #tpu.memory_space<vmem>>, vector<8x128xf32>,
    } else {
    }
    return
  }
  func.func @transform_0(%arg0: i32) -> (i32, i32) {
    %c0_i32 = arith.constant 0 : i32
    %c0_i32_0 = arith.constant 0 : i32
    return %arg0, %c0_i32 : i32, i32
  }
  func.func @transform_1(%arg0: i32) -> (i32, i32) {
    %c0_i32 = arith.constant 0 : i32
    %c0_i32_0 = arith.constant 0 : i32
    %c0_i32_1 = arith.constant 0 : i32
    return %c0_i32, %c0_i32_0 : i32, i32
  }
  func.func @transform_2(%arg0: i32) -> (i32, i32) {
    %c0_i32 = arith.constant 0 : i32
    %c0_i32_0 = arith.constant 0 : i32
    %c0_i32_1 = arith.constant 0 : i32
    return %c0_i32, %c0_i32_0 : i32, i32
  }
  func.func @transform_3(%arg0: i32) -> (i32, i32) {
    %c0_i32 = arith.constant 0 : i32
    %c0_i32_0 = arith.constant 0 : i32
    %c0_i32_1 = arith.constant 0 : i32
    return %c0_i32, %c0_i32_0 : i32, i32
  }
  func.func @transform_4(%arg0: i32) -> (i32, i32) {
    %c0_i32 = arith.constant 0 : i32
    %c0_i32_0 = arith.constant 0 : i32
    %c0_i32_1 = arith.constant 0 : i32
    return %c0_i32, %c0_i32_0 : i32, i32
  }
  func.func @transform_5(%arg0: i32) -> (i32, i32) {
    %c0_i32 = arith.constant 0 : i32
    %c0_i32_0 = arith.constant 0 : i32
    %c0_i32_1 = arith.constant 0 : i32
    return %c0_i32, %c0_i32_0 : i32, i32
  }
  func.func @transform_6(%arg0: i32) -> (i32, i32) {
    %c0_i32 = arith.constant 0 : i32
    %c0_i32_0 = arith.constant 0 : i32
    %c0_i32_1 = arith.constant 0 : i32
    return %c0_i32, %c0_i32_0 : i32, i32
  }
  func.func @transform_7(%arg0: i32) -> (i32, i32) {
    %c0_i32 = arith.constant 0 : i32
    %c0_i32_0 = arith.constant 0 : i32
    %c0_i32_1 = arith.constant 0 : i32
    return %c0_i32, %c0_i32_0 : i32, i32
  }
}

</mosaic_0001>

<llo_original>
// kernel: pollen_forward.1
$region0: #{pollen_forward.1}
  #allocation0 [shape = 'u32[]', space=smem, size = 0x4, offset = 0x4, fixed_abs, tag = 'smem constant byte address 0x4 - core index']
  #allocation1 [shape = 'u32[144,128]{1,0:T(1,128)}', space=vmem, size = 0x12000, scoped, tag = 'internal scratch']
  #allocation2 [shape = 'f32[8,128]{1,0:T(8,128)}', space=vmem, size = 0x1000, scoped, tag = 'scratch operand']
  %s0 = inlined_call_operand.vmem [shape: bf16[128,27], index: 0, kind: input, shape index: {}]
  %s1 = inlined_call_operand.vmem [shape: bf16[27,128], index: 1, kind: input, shape index: {}]
  %s2 = inlined_call_operand.vmem [shape: f32[1,128], index: 2, kind: input, shape index: {}]
  %s3 = inlined_call_operand.vmem [shape: bf16[128,128], index: 3, kind: input, shape index: {}]
  %s4 = inlined_call_operand.vmem [shape: f32[1,128], index: 4, kind: input, shape index: {}]
  %s5 = inlined_call_operand.vmem [shape: f32[128,128], index: 5, kind: input, shape index: {}]
  %s6 = inlined_call_operand.vmem [shape: f32[1,128], index: 6, kind: input, shape index: {}]
  %s7 = inlined_call_operand.vmem [shape: f32[8,128], index: 7, kind: output, shape index: {}]
  %s8 = sld [smem:[#allocation0]]
  $region46: #{pollen_forward.1} parent=0
    _
  %s10 = ssub.s32 1, %s8
  %s11 = scalar_select 0, %s10, %s8
  // Predicated region
  $region2: #{pollen_forward.1} parent=0 // pred_check
    _
  $region3: #{pollen_forward.1} parent=0 // pred_check_branch
    %13 = sbr.rel (0) target = $region5
  $region4: #{pollen_forward.1} parent=0 // pred_region
    _
  $region5: #{pollen_forward.1} parent=0 // pred_fallthru
    _
  // Predicated region
  $region6: #{pollen_forward.1} parent=0 // pred_check
    _
  $region7: #{pollen_forward.1} parent=0 // pred_check_branch
    %15 = sbr.rel (0) target = $region9
  $region8: #{pollen_forward.1} parent=0 // pred_region
    _
  $region9: #{pollen_forward.1} parent=0 // pred_fallthru
    _
  // Predicated region
  $region10: #{pollen_forward.1} parent=0 // pred_check
    _
  $region11: #{pollen_forward.1} parent=0 // pred_check_branch
    %17 = sbr.rel (0) target = $region13
  $region12: #{pollen_forward.1} parent=0 // pred_region
    _
  $region13: #{pollen_forward.1} parent=0 // pred_fallthru
    _
  // Predicated region
  $region14: #{pollen_forward.1} parent=0 // pred_check
    _
  $region15: #{pollen_forward.1} parent=0 // pred_check_branch
    %19 = sbr.rel (0) target = $region17
  $region16: #{pollen_forward.1} parent=0 // pred_region
    _
  $region17: #{pollen_forward.1} parent=0 // pred_fallthru
    _
  // Predicated region
  $region18: #{pollen_forward.1} parent=0 // pred_check
    _
  $region19: #{pollen_forward.1} parent=0 // pred_check_branch
    %21 = sbr.rel (0) target = $region21
  $region20: #{pollen_forward.1} parent=0 // pred_region
    _
  $region21: #{pollen_forward.1} parent=0 // pred_fallthru
    _
  // Predicated region
  $region22: #{pollen_forward.1} parent=0 // pred_check
    _
  $region23: #{pollen_forward.1} parent=0 // pred_check_branch
    %23 = sbr.rel (0) target = $region25
  $region24: #{pollen_forward.1} parent=0 // pred_region
    _
  $region25: #{pollen_forward.1} parent=0 // pred_fallthru
    _
  // Predicated region
  $region26: #{pollen_forward.1} parent=0 // pred_check
    _
  $region27: #{pollen_forward.1} parent=0 // pred_check_branch
    %25 = sbr.rel (0) target = $region29
  $region28: #{pollen_forward.1} parent=0 // pred_region
    _
  $region29: #{pollen_forward.1} parent=0 // pred_fallthru
    _
  %p27 = scmp.eq.s32.totalorder 0, 0
  // Predicated region
  $region30: #{pollen_forward.1} parent=0 // pred_check
    %p28 = pneg %p27
  $region31: #{pollen_forward.1} parent=0 // pred_check_branch
    %30 = sbr.rel (%p28) target = $region33
  $region32: #{pollen_forward.1} parent=0 // pred_region
    %31 = vst [vmem:[#allocation2] sm:$0xff] 0.0
  $region33: #{pollen_forward.1} parent=0 // pred_fallthru
    _
  %v32 = vld [vmem:[%s0] sm:$0xf]
  %v33 = vld [vmem:[%s0 + $0x4] sm:$0xf]
  %v34 = vld [vmem:[%s0 + $0x8] sm:$0xf]
  %v35 = vld [vmem:[%s0 + $0xc] sm:$0xf]
  %v36 = vld [vmem:[%s0 + $0x10] sm:$0xf]
  %v37 = vld [vmem:[%s0 + $0x14] sm:$0xf]
  %v38 = vld [vmem:[%s0 + $0x18] sm:$0xf]
  %v39 = vld [vmem:[%s0 + $0x1c] sm:$0xf]
  %v40 = vld [vmem:[%s0 + $0x20] sm:$0xf]
  %v41 = vld [vmem:[%s0 + $0x24] sm:$0xf]
  %v42 = vld [vmem:[%s0 + $0x28] sm:$0xf]
  %v43 = vld [vmem:[%s0 + $0x2c] sm:$0xf]
  %v44 = vld [vmem:[%s0 + $0x30] sm:$0xf]
  %v45 = vld [vmem:[%s0 + $0x34] sm:$0xf]
  %v46 = vld [vmem:[%s0 + $0x38] sm:$0xf]
  %v47 = vld [vmem:[%s0 + $0x3c] sm:$0xf]
  %v48 = vld [vmem:[%s1] sm:$0xf]
  %v49 = vld [vmem:[%s1 + $0x4] sm:$0xf]
  %v50 = vld [vmem:[%s1 + $0x8] sm:$0xf]
  %v51 = vld [vmem:[%s1 + $0xc] sm:$0x3]
  %v52 = vld [vmem:[%s2] sm:$0x1]
  %v54 = vlaneseq
  %v55 = vshrl.u32 %v54, 7
  %v56 = vsub.s32 0, %v55
  %v57 = vrot.slane %v52, %v56
  %v75 = vunpack.c.l.b16 %v32
  %v76 = vunpack.c.l.b16 %v33
  %v77 = vunpack.c.l.b16 %v34
  %v78 = vunpack.c.l.b16 %v35
  %v79 = vunpack.c.l.b16 %v36
  %v80 = vunpack.c.l.b16 %v37
  %v81 = vunpack.c.l.b16 %v38
  %v82 = vunpack.c.l.b16 %v39
  %v83 = vunpack.c.l.b16 %v40
  %v84 = vunpack.c.l.b16 %v41
  %v85 = vunpack.c.l.b16 %v42
  %v86 = vunpack.c.l.b16 %v43
  %v87 = vunpack.c.l.b16 %v44
  %v88 = vunpack.c.l.b16 %v45
  %v89 = vunpack.c.l.b16 %v46
  %v90 = vunpack.c.l.b16 %v47
  %v91 = vpack.c.b16 %v76, %v75
  %v92 = vpack.c.b16 %v78, %v77
  %v93 = vpack.c.b16 %v80, %v79
  %v94 = vpack.c.b16 %v82, %v81
  %v95 = vpack.c.b16 %v84, %v83
  %v96 = vpack.c.b16 %v86, %v85
  %v97 = vpack.c.b16 %v88, %v87
  %v98 = vpack.c.b16 %v90, %v89
  %v103 = vunpack.c.l.b16 %v48
  %v104 = vunpack.c.l.b16 %v49
  %v105 = vunpack.c.l.b16 %v50
  %v106 = vunpack.c.l.b16 %v51
  %v107 = vpack.c.b16 %v104, %v103
  %v108 = vpack.c.b16 %v106, %v105
  %vm110 = vcmask 220160
  %v112 = vsel %vm110, %v91, 0
  %v115 = vsel %vm110, %v92, 0
  %v118 = vsel %vm110, %v93, 0
  %v121 = vsel %vm110, %v94, 0
  %v124 = vsel %vm110, %v95, 0
  %v127 = vsel %vm110, %v96, 0
  %v130 = vsel %vm110, %v97, 0
  %v133 = vsel %vm110, %v98, 0
  %vm135 = vcmask 1044480
  %vm136 = vcmask 1045504
  %v137 = vsel %vm135, 4294967295, 65535
  %v138 = vsel %vm136, %v137, 0
  %v140 = vand.u32 %v108, %v138
  %142 = vmatprep.subr.bf16.mxu0 0
  %143 = vmatpush1.bf16.msra.mxu0 %v107
  %144 = vmatprep.subr.bf16.mxu0 0
  %145 = vmatpush1.bf16.msra.mxu0 %v140
  %146 = vmatprep.subr.bf16.mxu0 0
  %147 = vmatpush1.bf16.msra.mxu0 0
  %148 = vmatprep.subr.bf16.mxu0 0
  %149 = vmatpush1.bf16.msra.mxu0 0
  %150 = vmatprep.subr.bf16.mxu0 0
  %151 = vmatpush1.bf16.msra.mxu0 0
  %152 = vmatprep.subr.bf16.mxu0 0
  %153 = vmatpush1.bf16.msra.mxu0 0
  %154 = vmatprep.subr.bf16.mxu0 0
  %155 = vmatpush1.bf16.msra.mxu0 0
  %156 = vmatprep.subr.bf16.mxu0 0
  %157 = vmatpush1.bf16.msra.mxu0 0
  %158 = vmatprep.subr.bf16.mxu0 0
  %159 = vmatpush1.bf16.msra.mxu0 0
  %160 = vmatprep.subr.bf16.mxu0 0
  %161 = vmatpush1.bf16.msra.mxu0 0
  %162 = vmatprep.subr.bf16.mxu0 0
  %163 = vmatpush1.bf16.msra.mxu0 0
  %164 = vmatprep.subr.bf16.mxu0 0
  %165 = vmatpush1.bf16.msra.mxu0 0
  %166 = vmatprep.subr.bf16.mxu0 0
  %167 = vmatpush1.bf16.msra.mxu0 0
  %168 = vmatprep.subr.bf16.mxu0 0
  %169 = vmatpush1.bf16.msra.mxu0 0
  %170 = vmatprep.subr.bf16.mxu0 0
  %171 = vmatpush1.bf16.msra.mxu0 0
  %172 = vmatprep.subr.bf16.mxu0 0
  %173 = vmatpush1.bf16.msra.mxu0 0
  %174 = vmatprep.mubr.bf16.mxu0 0
  %175 = vmatmul.mubr.bf16.gmra.mrb[0].mxu0 %v112
  %v176 = vpop.f32.mrb[0].mxu0
  %v177 = vadd.f32 %v57, %v176
  %v178 = vpop.f32.mrb[0].mxu0
  %v179 = vpop.f32.mrb[0].mxu0
  %v180 = vadd.f32 %v57, %v179
  %v181 = vpop.f32.mrb[0].mxu0
  %182 = vmatprep.mubr.bf16.mxu0 0
  %183 = vmatmul.mubr.bf16.gmra.mrb[0].mxu0 %v115
  %v184 = vpop.f32.mrb[0].mxu0
  %v185 = vadd.f32 %v57, %v184
  %v186 = vpop.f32.mrb[0].mxu0
  %v187 = vpop.f32.mrb[0].mxu0
  %v188 = vadd.f32 %v57, %v187
  %v189 = vpop.f32.mrb[0].mxu0
  %190 = vmatprep.mubr.bf16.mxu0 0
  %191 = vmatmul.mubr.bf16.gmra.mrb[0].mxu0 %v118
  %v192 = vpop.f32.mrb[0].mxu0
  %v193 = vadd.f32 %v57, %v192
  %v194 = vpop.f32.mrb[0].mxu0
  %v195 = vpop.f32.mrb[0].mxu0
  %v196 = vadd.f32 %v57, %v195
  %v197 = vpop.f32.mrb[0].mxu0
  %198 = vmatprep.mubr.bf16.mxu0 0
  %199 = vmatmul.mubr.bf16.gmra.mrb[0].mxu0 %v121
  %v200 = vpop.f32.mrb[0].mxu0
  %v201 = vadd.f32 %v57, %v200
  %v202 = vpop.f32.mrb[0].mxu0
  %v203 = vpop.f32.mrb[0].mxu0
  %v204 = vadd.f32 %v57, %v203
  %v205 = vpop.f32.mrb[0].mxu0
  %206 = vmatprep.mubr.bf16.mxu0 0
  %207 = vmatmul.mubr.bf16.gmra.mrb[0].mxu0 %v124
  %v208 = vpop.f32.mrb[0].mxu0
  %v209 = vadd.f32 %v57, %v208
  %v210 = vpop.f32.mrb[0].mxu0
  %v211 = vpop.f32.mrb[0].mxu0
  %v212 = vadd.f32 %v57, %v211
  %v213 = vpop.f32.mrb[0].mxu0
  %214 = vmatprep.mubr.bf16.mxu0 0
  %215 = vmatmul.mubr.bf16.gmra.mrb[0].mxu0 %v127
  %v216 = vpop.f32.mrb[0].mxu0
  %v217 = vadd.f32 %v57, %v216
  %v218 = vpop.f32.mrb[0].mxu0
  %v219 = vpop.f32.mrb[0].mxu0
  %v220 = vadd.f32 %v57, %v219
  %v221 = vpop.f32.mrb[0].mxu0
  %222 = vmatprep.mubr.bf16.mxu0 0
  %223 = vmatmul.mubr.bf16.gmra.mrb[0].mxu0 %v130
  %v224 = vpop.f32.mrb[0].mxu0
  %v225 = vadd.f32 %v57, %v224
  %v226 = vpop.f32.mrb[0].mxu0
  %v227 = vpop.f32.mrb[0].mxu0
  %v228 = vadd.f32 %v57, %v227
  %v229 = vpop.f32.mrb[0].mxu0
  %230 = vmatprep.mubr.bf16.mxu0 0
  %231 = vmatmul.mubr.bf16.gmra.mrb[0].mxu0 %v133
  %v232 = vpop.f32.mrb[0].mxu0
  %v233 = vadd.f32 %v57, %v232
  %v234 = vpop.f32.mrb[0].mxu0
  %v235 = vpop.f32.mrb[0].mxu0
  %v236 = vadd.f32 %v57, %v235
  %v237 = vpop.f32.mrb[0].mxu0
  %238 = vdwg.mxu0
  %v239 = vmul.f32 %v177, 0.5
  %v240 = vmul.f32 %v180, 0.5
  %v241 = vmul.f32 %v185, 0.5
  %v242 = vmul.f32 %v188, 0.5
  %v243 = vmul.f32 %v193, 0.5
  %v244 = vmul.f32 %v196, 0.5
  %v245 = vmul.f32 %v201, 0.5
  %v246 = vmul.f32 %v204, 0.5
  %v247 = vmul.f32 %v209, 0.5
  %v248 = vmul.f32 %v212, 0.5
  %v249 = vmul.f32 %v217, 0.5
  %v250 = vmul.f32 %v220, 0.5
  %v251 = vmul.f32 %v225, 0.5
  %v252 = vmul.f32 %v228, 0.5
  %v253 = vmul.f32 %v233, 0.5
  %v254 = vmul.f32 %v236, 0.5
  %v255 = vtanh.pop %v239
  %v256 = vtanh.pop %v240
  %v257 = vtanh.pop %v241
  %v258 = vtanh.pop %v242
  %v259 = vtanh.pop %v243
  %v260 = vtanh.pop %v244
  %v261 = vtanh.pop %v245
  %v262 = vtanh.pop %v246
  %v263 = vtanh.pop %v247
  %v264 = vtanh.pop %v248
  %v265 = vtanh.pop %v249
  %v266 = vtanh.pop %v250
  %v267 = vtanh.pop %v251
  %v268 = vtanh.pop %v252
  %v269 = vtanh.pop %v253
  %v270 = vtanh.pop %v254
  %v271 = vadd.f32 %v255, 1.0
  %v272 = vadd.f32 %v256, 1.0
  %v273 = vadd.f32 %v257, 1.0
  %v274 = vadd.f32 %v258, 1.0
  %v275 = vadd.f32 %v259, 1.0
  %v276 = vadd.f32 %v260, 1.0
  %v277 = vadd.f32 %v261, 1.0
  %v278 = vadd.f32 %v262, 1.0
  %v279 = vadd.f32 %v263, 1.0
  %v280 = vadd.f32 %v264, 1.0
  %v281 = vadd.f32 %v265, 1.0
  %v282 = vadd.f32 %v266, 1.0
  %v283 = vadd.f32 %v267, 1.0
  %v284 = vadd.f32 %v268, 1.0
  %v285 = vadd.f32 %v269, 1.0
  %v286 = vadd.f32 %v270, 1.0
  %v287 = vmul.f32 %v239, %v271
  %v288 = vmul.f32 %v240, %v272
  %v289 = vmul.f32 %v241, %v273
  %v290 = vmul.f32 %v242, %v274
  %v291 = vmul.f32 %v243, %v275
  %v292 = vmul.f32 %v244, %v276
  %v293 = vmul.f32 %v245, %v277
  %v294 = vmul.f32 %v246, %v278
  %v295 = vmul.f32 %v247, %v279
  %v296 = vmul.f32 %v248, %v280
  %v297 = vmul.f32 %v249, %v281
  %v298 = vmul.f32 %v250, %v282
  %v299 = vmul.f32 %v251, %v283
  %v300 = vmul.f32 %v252, %v284
  %v301 = vmul.f32 %v253, %v285
  %v302 = vmul.f32 %v254, %v286
  %v303 = vpack.c.bf16 %v288, %v287
  %v304 = vpack.c.bf16 %v290, %v289
  %v305 = vpack.c.bf16 %v292, %v291
  %v306 = vpack.c.bf16 %v294, %v293
  %v307 = vpack.c.bf16 %v296, %v295
  %v308 = vpack.c.bf16 %v298, %v297
  %v309 = vpack.c.bf16 %v300, %v299
  %v310 = vpack.c.bf16 %v302, %v301
  %v311 = vld [vmem:[%s3] sm:$0xf]
  %v312 = vld [vmem:[%s3 + $0x4] sm:$0xf]
  %v313 = vld [vmem:[%s3 + $0x8] sm:$0xf]
  %v314 = vld [vmem:[%s3 + $0xc] sm:$0xf]
  %v315 = vld [vmem:[%s3 + $0x10] sm:$0xf]
  %v316 = vld [vmem:[%s3 + $0x14] sm:$0xf]
  %v317 = vld [vmem:[%s3 + $0x18] sm:$0xf]
  %v318 = vld [vmem:[%s3 + $0x1c] sm:$0xf]
  %v319 = vld [vmem:[%s3 + $0x20] sm:$0xf]
  %v320 = vld [vmem:[%s3 + $0x24] sm:$0xf]
  %v321 = vld [vmem:[%s3 + $0x28] sm:$0xf]
  %v322 = vld [vmem:[%s3 + $0x2c] sm:$0xf]
  %v323 = vld [vmem:[%s3 + $0x30] sm:$0xf]
  %v324 = vld [vmem:[%s3 + $0x34] sm:$0xf]
  %v325 = vld [vmem:[%s3 + $0x38] sm:$0xf]
  %v326 = vld [vmem:[%s3 + $0x3c] sm:$0xf]
  %v327 = vld [vmem:[%s4] sm:$0x1]
  %v329 = vlaneseq
  %v330 = vshrl.u32 %v329, 7
  %v331 = vsub.s32 0, %v330
  %v332 = vrot.slane %v327, %v331
  %v350 = vunpack.c.l.b16 %v311
  %v351 = vunpack.c.l.b16 %v312
  %v352 = vunpack.c.l.b16 %v313
  %v353 = vunpack.c.l.b16 %v314
  %v354 = vunpack.c.l.b16 %v315
  %v355 = vunpack.c.l.b16 %v316
  %v356 = vunpack.c.l.b16 %v317
  %v357 = vunpack.c.l.b16 %v318
  %v358 = vunpack.c.l.b16 %v319
  %v359 = vunpack.c.l.b16 %v320
  %v360 = vunpack.c.l.b16 %v321
  %v361 = vunpack.c.l.b16 %v322
  %v362 = vunpack.c.l.b16 %v323
  %v363 = vunpack.c.l.b16 %v324
  %v364 = vunpack.c.l.b16 %v325
  %v365 = vunpack.c.l.b16 %v326
  %v366 = vpack.c.b16 %v351, %v350
  %v367 = vpack.c.b16 %v353, %v352
  %v368 = vpack.c.b16 %v355, %v354
  %v369 = vpack.c.b16 %v357, %v356
  %v370 = vpack.c.b16 %v359, %v358
  %v371 = vpack.c.b16 %v361, %v360
  %v372 = vpack.c.b16 %v363, %v362
  %v373 = vpack.c.b16 %v365, %v364
  %382 = vmatprep.subr.bf16.mxu0 0
  %383 = vmatpush1.bf16.msra.mxu0 %v366
  %384 = vmatprep.subr.bf16.mxu0 0
  %385 = vmatpush1.bf16.msra.mxu0 %v367
  %386 = vmatprep.subr.bf16.mxu0 0
  %387 = vmatpush1.bf16.msra.mxu0 %v368
  %388 = vmatprep.subr.bf16.mxu0 0
  %389 = vmatpush1.bf16.msra.mxu0 %v369
  %390 = vmatprep.subr.bf16.mxu0 0
  %391 = vmatpush1.bf16.msra.mxu0 %v370
  %392 = vmatprep.subr.bf16.mxu0 0
  %393 = vmatpush1.bf16.msra.mxu0 %v371
  %394 = vmatprep.subr.bf16.mxu0 0
  %395 = vmatpush1.bf16.msra.mxu0 %v372
  %396 = vmatprep.subr.bf16.mxu0 0
  %397 = vmatpush1.bf16.msra.mxu0 %v373
  %398 = vmatprep.subr.bf16.mxu0 0
  %399 = vmatpush1.bf16.msra.mxu0 0
  %400 = vmatprep.subr.bf16.mxu0 0
  %401 = vmatpush1.bf16.msra.mxu0 0
  %402 = vmatprep.subr.bf16.mxu0 0
  %403 = vmatpush1.bf16.msra.mxu0 0
  %404 = vmatprep.subr.bf16.mxu0 0
  %405 = vmatpush1.bf16.msra.mxu0 0
  %406 = vmatprep.subr.bf16.mxu0 0
  %407 = vmatpush1.bf16.msra.mxu0 0
  %408 = vmatprep.subr.bf16.mxu0 0
  %409 = vmatpush1.bf16.msra.mxu0 0
  %410 = vmatprep.subr.bf16.mxu0 0
  %411 = vmatpush1.bf16.msra.mxu0 0
  %412 = vmatprep.subr.bf16.mxu0 0
  %413 = vmatpush1.bf16.msra.mxu0 0
  %414 = vmatprep.mubr.bf16.mxu0 0
  %415 = vmatmul.mubr.bf16.gmra.mrb[0].mxu0 %v303
  %v416 = vpop.f32.mrb[0].mxu0
  %v417 = vadd.f32 %v332, %v416
  %v418 = vpop.f32.mrb[0].mxu0
  %v419 = vpop.f32.mrb[0].mxu0
  %v420 = vadd.f32 %v332, %v419
  %v421 = vpop.f32.mrb[0].mxu0
  %422 = vmatprep.mubr.bf16.mxu0 0
  %423 = vmatmul.mubr.bf16.gmra.mrb[0].mxu0 %v304
  %v424 = vpop.f32.mrb[0].mxu0
  %v425 = vadd.f32 %v332, %v424
  %v426 = vpop.f32.mrb[0].mxu0
  %v427 = vpop.f32.mrb[0].mxu0
  %v428 = vadd.f32 %v332, %v427
  %v429 = vpop.f32.mrb[0].mxu0
  %430 = vmatprep.mubr.bf16.mxu0 0
  %431 = vmatmul.mubr.bf16.gmra.mrb[0].mxu0 %v305
  %v432 = vpop.f32.mrb[0].mxu0
  %v433 = vadd.f32 %v332, %v432
  %v434 = vpop.f32.mrb[0].mxu0
  %v435 = vpop.f32.mrb[0].mxu0
  %v436 = vadd.f32 %v332, %v435
  %v437 = vpop.f32.mrb[0].mxu0
  %438 = vmatprep.mubr.bf16.mxu0 0
  %439 = vmatmul.mubr.bf16.gmra.mrb[0].mxu0 %v306
  %v440 = vpop.f32.mrb[0].mxu0
  %v441 = vadd.f32 %v332, %v440
  %v442 = vpop.f32.mrb[0].mxu0
  %v443 = vpop.f32.mrb[0].mxu0
  %v444 = vadd.f32 %v332, %v443
  %v445 = vpop.f32.mrb[0].mxu0
  %446 = vmatprep.mubr.bf16.mxu0 0
  %447 = vmatmul.mubr.bf16.gmra.mrb[0].mxu0 %v307
  %v448 = vpop.f32.mrb[0].mxu0
  %v449 = vadd.f32 %v332, %v448
  %v450 = vpop.f32.mrb[0].mxu0
  %v451 = vpop.f32.mrb[0].mxu0
  %v452 = vadd.f32 %v332, %v451
  %v453 = vpop.f32.mrb[0].mxu0
  %454 = vmatprep.mubr.bf16.mxu0 0
  %455 = vmatmul.mubr.bf16.gmra.mrb[0].mxu0 %v308
  %v456 = vpop.f32.mrb[0].mxu0
  %v457 = vadd.f32 %v332, %v456
  %v458 = vpop.f32.mrb[0].mxu0
  %v459 = vpop.f32.mrb[0].mxu0
  %v460 = vadd.f32 %v332, %v459
  %v461 = vpop.f32.mrb[0].mxu0
  %462 = vmatprep.mubr.bf16.mxu0 0
  %463 = vmatmul.mubr.bf16.gmra.mrb[0].mxu0 %v309
  %v464 = vpop.f32.mrb[0].mxu0
  %v465 = vadd.f32 %v332, %v464
  %v466 = vpop.f32.mrb[0].mxu0
  %v467 = vpop.f32.mrb[0].mxu0
  %v468 = vadd.f32 %v332, %v467
  %v469 = vpop.f32.mrb[0].mxu0
  %470 = vmatprep.mubr.bf16.mxu0 0
  %471 = vmatmul.mubr.bf16.gmra.mrb[0].mxu0 %v310
  %v472 = vpop.f32.mrb[0].mxu0
  %v473 = vadd.f32 %v332, %v472
  %v474 = vpop.f32.mrb[0].mxu0
  %v475 = vpop.f32.mrb[0].mxu0
  %v476 = vadd.f32 %v332, %v475
  %v477 = vpop.f32.mrb[0].mxu0
  %478 = vdwg.mxu0
  %v479 = vmul.f32 %v417, 0.5
  %v480 = vmul.f32 %v420, 0.5
  %v481 = vmul.f32 %v425, 0.5
  %v482 = vmul.f32 %v428, 0.5
  %v483 = vmul.f32 %v433, 0.5
  %v484 = vmul.f32 %v436, 0.5
  %v485 = vmul.f32 %v441, 0.5
  %v486 = vmul.f32 %v444, 0.5
  %v487 = vmul.f32 %v449, 0.5
  %v488 = vmul.f32 %v452, 0.5
  %v489 = vmul.f32 %v457, 0.5
  %v490 = vmul.f32 %v460, 0.5
  %v491 = vmul.f32 %v465, 0.5
  %v492 = vmul.f32 %v468, 0.5
  %v493 = vmul.f32 %v473, 0.5
  %v494 = vmul.f32 %v476, 0.5
  %v495 = vtanh.pop %v479
  %v496 = vtanh.pop %v480
  %v497 = vtanh.pop %v481
  %v498 = vtanh.pop %v482
  %v499 = vtanh.pop %v483
  %v500 = vtanh.pop %v484
  %v501 = vtanh.pop %v485
  %v502 = vtanh.pop %v486
  %v503 = vtanh.pop %v487
  %v504 = vtanh.pop %v488
  %v505 = vtanh.pop %v489
  %v506 = vtanh.pop %v490
  %v507 = vtanh.pop %v491
  %v508 = vtanh.pop %v492
  %v509 = vtanh.pop %v493
  %v510 = vtanh.pop %v494
  %v511 = vadd.f32 %v495, 1.0
  %v512 = vadd.f32 %v496, 1.0
  %v513 = vadd.f32 %v497, 1.0
  %v514 = vadd.f32 %v498, 1.0
  %v515 = vadd.f32 %v499, 1.0
  %v516 = vadd.f32 %v500, 1.0
  %v517 = vadd.f32 %v501, 1.0
  %v518 = vadd.f32 %v502, 1.0
  %v519 = vadd.f32 %v503, 1.0
  %v520 = vadd.f32 %v504, 1.0
  %v521 = vadd.f32 %v505, 1.0
  %v522 = vadd.f32 %v506, 1.0
  %v523 = vadd.f32 %v507, 1.0
  %v524 = vadd.f32 %v508, 1.0
  %v525 = vadd.f32 %v509, 1.0
  %v526 = vadd.f32 %v510, 1.0
  %v527 = vmul.f32 %v479, %v511
  %v528 = vmul.f32 %v480, %v512
  %v529 = vmul.f32 %v481, %v513
  %v530 = vmul.f32 %v482, %v514
  %v531 = vmul.f32 %v483, %v515
  %v532 = vmul.f32 %v484, %v516
  %v533 = vmul.f32 %v485, %v517
  %v534 = vmul.f32 %v486, %v518
  %v535 = vmul.f32 %v487, %v519
  %v536 = vmul.f32 %v488, %v520
  %v537 = vmul.f32 %v489, %v521
  %v538 = vmul.f32 %v490, %v522
  %v539 = vmul.f32 %v491, %v523
  %v540 = vmul.f32 %v492, %v524
  %v541 = vmul.f32 %v493, %v525
  %v542 = vmul.f32 %v494, %v526
  %s543 = smul.u32 0, 128
  %v544 = vlaneseq
  %v545 = vshrl.u32 %v544, 7
  %v546 = vadd.s32 %v545, 8
  %v547 = vadd.s32 %v545, 16
  %v548 = vadd.s32 %v545, 24
  %v549 = vadd.s32 %v545, 32
  %v550 = vadd.s32 %v545, 40
  %v551 = vadd.s32 %v545, 48
  %v552 = vadd.s32 %v545, 56
  %v553 = vadd.s32 %v545, 64
  %v554 = vadd.s32 %v545, 72
  %v555 = vadd.s32 %v545, 80
  %v556 = vadd.s32 %v545, 88
  %v557 = vadd.s32 %v545, 96
  %v558 = vadd.s32 %v545, 104
  %v559 = vadd.s32 %v545, 112
  %v560 = vadd.s32 %v545, 120
  %v561 = vstv %s543
  %v562 = vadd.s32 %v561, %v545
  %v563 = vadd.s32 %v561, %v546
  %v564 = vadd.s32 %v561, %v547
  %v565 = vadd.s32 %v561, %v548
  %v566 = vadd.s32 %v561, %v549
  %v567 = vadd.s32 %v561, %v550
  %v568 = vadd.s32 %v561, %v551
  %v569 = vadd.s32 %v561, %v552
  %v570 = vadd.s32 %v561, %v553
  %v571 = vadd.s32 %v561, %v554
  %v572 = vadd.s32 %v561, %v555
  %v573 = vadd.s32 %v561, %v556
  %v574 = vadd.s32 %v561, %v557
  %v575 = vadd.s32 %v561, %v558
  %v576 = vadd.s32 %v561, %v559
  %v577 = vadd.s32 %v561, %v560
  %vm578 = vcmp.lt.s32.totalorder %v562, 128
  %vm579 = vcmp.lt.s32.totalorder %v563, 128
  %vm580 = vcmp.lt.s32.totalorder %v564, 128
  %vm581 = vcmp.lt.s32.totalorder %v565, 128
  %vm582 = vcmp.lt.s32.totalorder %v566, 128
  %vm583 = vcmp.lt.s32.totalorder %v567, 128
  %vm584 = vcmp.lt.s32.totalorder %v568, 128
  %vm585 = vcmp.lt.s32.totalorder %v569, 128
  %vm586 = vcmp.lt.s32.totalorder %v570, 128
  %vm587 = vcmp.lt.s32.totalorder %v571, 128
  %vm588 = vcmp.lt.s32.totalorder %v572, 128
  %vm589 = vcmp.lt.s32.totalorder %v573, 128
  %vm590 = vcmp.lt.s32.totalorder %v574, 128
  %vm591 = vcmp.lt.s32.totalorder %v575, 128
  %vm592 = vcmp.lt.s32.totalorder %v576, 128
  %vm593 = vcmp.lt.s32.totalorder %v577, 128
  %v594 = vsel %vm578, 1, 0
  %v595 = vsel %vm579, 1, 0
  %v596 = vsel %vm580, 1, 0
  %v597 = vsel %vm581, 1, 0
  %v598 = vsel %vm582, 1, 0
  %v599 = vsel %vm583, 1, 0
  %v600 = vsel %vm584, 1, 0
  %v601 = vsel %vm585, 1, 0
  %v602 = vsel %vm586, 1, 0
  %v603 = vsel %vm587, 1, 0
  %v604 = vsel %vm588, 1, 0
  %v605 = vsel %vm589, 1, 0
  %v606 = vsel %vm590, 1, 0
  %v607 = vsel %vm591, 1, 0
  %v608 = vsel %vm592, 1, 0
  %v609 = vsel %vm593, 1, 0
  %vm610 = vcmp.eq.s32.totalorder %v594, 1
  %vm611 = vcmp.eq.s32.totalorder %v595, 1
  %vm612 = vcmp.eq.s32.totalorder %v596, 1
  %vm613 = vcmp.eq.s32.totalorder %v597, 1
  %vm614 = vcmp.eq.s32.totalorder %v598, 1
  %vm615 = vcmp.eq.s32.totalorder %v599, 1
  %vm616 = vcmp.eq.s32.totalorder %v600, 1
  %vm617 = vcmp.eq.s32.totalorder %v601, 1
  %vm618 = vcmp.eq.s32.totalorder %v602, 1
  %vm619 = vcmp.eq.s32.totalorder %v603, 1
  %vm620 = vcmp.eq.s32.totalorder %v604, 1
  %vm621 = vcmp.eq.s32.totalorder %v605, 1
  %vm622 = vcmp.eq.s32.totalorder %v606, 1
  %vm623 = vcmp.eq.s32.totalorder %v607, 1
  %vm624 = vcmp.eq.s32.totalorder %v608, 1
  %vm625 = vcmp.eq.s32.totalorder %v609, 1
  %v626 = vsel %vm610, %v527, 0.0
  %v627 = vsel %vm611, %v528, 0.0
  %v628 = vsel %vm612, %v529, 0.0
  %v629 = vsel %vm613, %v530, 0.0
  %v630 = vsel %vm614, %v531, 0.0
  %v631 = vsel %vm615, %v532, 0.0
  %v632 = vsel %vm616, %v533, 0.0
  %v633 = vsel %vm617, %v534, 0.0
  %v634 = vsel %vm618, %v535, 0.0
  %v635 = vsel %vm619, %v536, 0.0
  %v636 = vsel %vm620, %v537, 0.0
  %v637 = vsel %vm621, %v538, 0.0
  %v638 = vsel %vm622, %v539, 0.0
  %v639 = vsel %vm623, %v540, 0.0
  %v640 = vsel %vm624, %v541, 0.0
  %v641 = vsel %vm625, %v542, 0.0
  %v642 = vlaneseq
  %v643 = vand.u32 %v642, 127
  %v644 = vadd.s32 %v561, %v643
  %v645 = vmul.u32 %v545, 64
  %vm646 = vcmp.ge.s32.totalorder %v644, %v645
  %v647 = vadd.s32 %v645, 64
  %vm648 = vcmp.lt.s32.totalorder %v644, %v647
  %vm649 = vmand %vm646, %vm648
  %v650 = vsel %vm649, 1, 0
  %v651 = vcvt.s32.f32 %v650
  %v652 = vpack.c.bf16 %v651, %v651
  %v653 = vld [vmem:[#allocation2] sm:$0xff]
  %v654 = vpack.c.bf16 %v627, %v626
  %v655 = vpack.c.bf16 %v629, %v628
  %v656 = vpack.c.bf16 %v631, %v630
  %v657 = vpack.c.bf16 %v633, %v632
  %v658 = vpack.c.bf16 %v635, %v634
  %v659 = vpack.c.bf16 %v637, %v636
  %v660 = vpack.c.bf16 %v639, %v638
  %v661 = vpack.c.bf16 %v641, %v640
  %662 = vmatprep.subr.bf16.mxu0 0
  %663 = vmatpush1.bf16.msra.mxu0 %v654
  %664 = vmatprep.subr.bf16.mxu0 0
  %665 = vmatpush1.bf16.msra.mxu0 %v655
  %666 = vmatprep.subr.bf16.mxu0 0
  %667 = vmatpush1.bf16.msra.mxu0 %v656
  %668 = vmatprep.subr.bf16.mxu0 0
  %669 = vmatpush1.bf16.msra.mxu0 %v657
  %670 = vmatprep.subr.bf16.mxu0 0
  %671 = vmatpush1.bf16.msra.mxu0 %v658
  %672 = vmatprep.subr.bf16.mxu0 0
  %673 = vmatpush1.bf16.msra.mxu0 %v659
  %674 = vmatprep.subr.bf16.mxu0 0
  %675 = vmatpush1.bf16.msra.mxu0 %v660
  %676 = vmatprep.subr.bf16.mxu0 0
  %677 = vmatpush1.bf16.msra.mxu0 %v661
  %678 = vmatprep.subr.bf16.mxu0 0
  %679 = vmatpush1.bf16.msra.mxu0 0
  %680 = vmatprep.subr.bf16.mxu0 0
  %681 = vmatpush1.bf16.msra.mxu0 0
  %682 = vmatprep.subr.bf16.mxu0 0
  %683 = vmatpush1.bf16.msra.mxu0 0
  %684 = vmatprep.subr.bf16.mxu0 0
  %685 = vmatpush1.bf16.msra.mxu0 0
  %686 = vmatprep.subr.bf16.mxu0 0
  %687 = vmatpush1.bf16.msra.mxu0 0
  %688 = vmatprep.subr.bf16.mxu0 0
  %689 = vmatpush1.bf16.msra.mxu0 0
  %690 = vmatprep.subr.bf16.mxu0 0
  %691 = vmatpush1.bf16.msra.mxu0 0
  %692 = vmatprep.subr.bf16.mxu0 0
  %693 = vmatpush1.bf16.msra.mxu0 0
  %694 = vmatprep.mubr.bf16.mxu0 0
  %695 = vmatmul.mubr.bf16.gmra.mrb[0].mxu0 %v652
  %v696 = vpop.f32.mrb[0].mxu0
  %v697 = vadd.f32 0.0, %v696
  %v698 = vpop.f32.mrb[0].mxu0
  %v699 = vpop.f32.mrb[0].mxu0
  %v700 = vpop.f32.mrb[0].mxu0
  %701 = vdwg.mxu0
  %v702 = vadd.f32 %v653, %v697
  %703 = vst [vmem:[#allocation2] sm:$0xff] %v702
  // Predicated region
  $region34: #{pollen_forward.1} parent=0 // pred_check
    %p704 = pneg %p27
  $region35: #{pollen_forward.1} parent=0 // pred_check_branch
    %706 = sbr.rel (%p704) target = $region37
  $region36: #{pollen_forward.1} parent=0 // pred_region
    %v707 = vld [vmem:[#allocation2] sm:$0xff]
    %v708 = vmul.f32 %v707, 0.015625
    %v709 = vld [vmem:[%s5] sm:$0xff]
    %v710 = vld [vmem:[%s5 + $0x8] sm:$0xff]
    %v711 = vld [vmem:[%s5 + $0x10] sm:$0xff]
    %v712 = vld [vmem:[%s5 + $0x18] sm:$0xff]
    %v713 = vld [vmem:[%s5 + $0x20] sm:$0xff]
    %v714 = vld [vmem:[%s5 + $0x28] sm:$0xff]
    %v715 = vld [vmem:[%s5 + $0x30] sm:$0xff]
    %v716 = vld [vmem:[%s5 + $0x38] sm:$0xff]
    %v717 = vld [vmem:[%s5 + $0x40] sm:$0xff]
    %v718 = vld [vmem:[%s5 + $0x48] sm:$0xff]
    %v719 = vld [vmem:[%s5 + $0x50] sm:$0xff]
    %v720 = vld [vmem:[%s5 + $0x58] sm:$0xff]
    %v721 = vld [vmem:[%s5 + $0x60] sm:$0xff]
    %v722 = vld [vmem:[%s5 + $0x68] sm:$0xff]
    %v723 = vld [vmem:[%s5 + $0x70] sm:$0xff]
    %v724 = vld [vmem:[%s5 + $0x78] sm:$0xff]
    %v725 = vld [vmem:[%s6] sm:$0x1]
    %v727 = vlaneseq
    %v728 = vshrl.u32 %v727, 7
    %v729 = vsub.s32 0, %v728
    %v730 = vrot.slane %v725, %v729
    %732 = vmatprep.subr.mxu0 0.0
    %733 = vmatpush1.msra.mxu0 %v709
    %734 = vmatprep.subr.mxu0 0.0
    %735 = vmatpush1.msra.mxu0 %v710
    %736 = vmatprep.subr.mxu0 0.0
    %737 = vmatpush1.msra.mxu0 %v711
    %738 = vmatprep.subr.mxu0 0.0
    %739 = vmatpush1.msra.mxu0 %v712
    %740 = vmatprep.subr.mxu0 0.0
    %741 = vmatpush1.msra.mxu0 %v713
    %742 = vmatprep.subr.mxu0 0.0
    %743 = vmatpush1.msra.mxu0 %v714
    %744 = vmatprep.subr.mxu0 0.0
    %745 = vmatpush1.msra.mxu0 %v715
    %746 = vmatprep.subr.mxu0 0.0
    %747 = vmatpush1.msra.mxu0 %v716
    %748 = vmatprep.subr.mxu0 0.0
    %749 = vmatpush1.msra.mxu0 %v717
    %750 = vmatprep.subr.mxu0 0.0
    %751 = vmatpush1.msra.mxu0 %v718
    %752 = vmatprep.subr.mxu0 0.0
    %753 = vmatpush1.msra.mxu0 %v719
    %754 = vmatprep.subr.mxu0 0.0
    %755 = vmatpush1.msra.mxu0 %v720
    %756 = vmatprep.subr.mxu0 0.0
    %757 = vmatpush1.msra.mxu0 %v721
    %758 = vmatprep.subr.mxu0 0.0
    %759 = vmatpush1.msra.mxu0 %v722
    %760 = vmatprep.subr.mxu0 0.0
    %761 = vmatpush1.msra.mxu0 %v723
    %762 = vmatprep.subr.mxu0 0.0
    %763 = vmatpush1.msra.mxu0 %v724
    %764 = vmatprep.subr.mxu0 0.0
    %765 = vmatpush1.msra.mxu0 0.0
    %766 = vmatprep.subr.mxu0 0.0
    %767 = vmatpush1.msra.mxu0 0.0
    %768 = vmatprep.subr.mxu0 0.0
    %769 = vmatpush1.msra.mxu0 0.0
    %770 = vmatprep.subr.mxu0 0.0
    %771 = vmatpush1.msra.mxu0 0.0
    %772 = vmatprep.subr.mxu0 0.0
    %773 = vmatpush1.msra.mxu0 0.0
    %774 = vmatprep.subr.mxu0 0.0
    %775 = vmatpush1.msra.mxu0 0.0
    %776 = vmatprep.subr.mxu0 0.0
    %777 = vmatpush1.msra.mxu0 0.0
    %778 = vmatprep.subr.mxu0 0.0
    %779 = vmatpush1.msra.mxu0 0.0
    %780 = vmatprep.subr.mxu0 0.0
    %781 = vmatpush1.msra.mxu0 0.0
    %782 = vmatprep.subr.mxu0 0.0
    %783 = vmatpush1.msra.mxu0 0.0
    %784 = vmatprep.subr.mxu0 0.0
    %785 = vmatpush1.msra.mxu0 0.0
    %786 = vmatprep.subr.mxu0 0.0
    %787 = vmatpush1.msra.mxu0 0.0
    %788 = vmatprep.subr.mxu0 0.0
    %789 = vmatpush1.msra.mxu0 0.0
    %790 = vmatprep.subr.mxu0 0.0
    %791 = vmatpush1.msra.mxu0 0.0
    %792 = vmatprep.subr.mxu0 0.0
    %793 = vmatpush1.msra.mxu0 0.0
    %794 = vmatprep.subr.mxu0 0.0
    %795 = vmatpush1.msra.mxu0 0.0
    %796 = vmatprep.mubr.f32.mxu0 0.0
    %797 = vmatmul.mubr.f32.gmra.mrb[0].mxu0 %v708
    %v798 = vpop.f32.mrb[0].mxu0
    %v799 = vadd.f32 %v730, %v798
    %v800 = vpop.f32.mrb[0].mxu0
    %801 = vdwg.mxu0
    %802 = vst [vmem:[%s7] sm:$0xff] %v799
  $region37: #{pollen_forward.1} parent=0 // pred_fallthru
    _
  // Predicated region
  $region38: #{pollen_forward.1} parent=0 // pred_check
    _
  $region39: #{pollen_forward.1} parent=0 // pred_check_branch
    %804 = sbr.rel (0) target = $region41
  $region40: #{pollen_forward.1} parent=0 // pred_region
    _
  $region41: #{pollen_forward.1} parent=0 // pred_fallthru
    _
  // Predicated region
  $region42: #{pollen_forward.1} parent=0 // pred_check
    _
  $region43: #{pollen_forward.1} parent=0 // pred_check_branch
    %806 = sbr.rel (0) target = $region45
  $region44: #{pollen_forward.1} parent=0 // pred_region
    _
  $region45: #{pollen_forward.1} parent=0 // pred_fallthru
    _

</llo_original>
